<compile_context>
chip_gen: v5e
topology: v5e:2x2
jax: 0.10.0
libtpu: 0.0.40
codegen_flags: <defaults>
</compile_context>

<pallas_src>
import functools

import jax
import jax.numpy as jnp
from jax.experimental import pallas as pl
from jax.experimental.pallas import tpu as pltpu


def _quantize_kernel(scale_ref, zp_ref, x_ref, o_ref, *, qmin, qmax, zp_is_integer):
    # scale_ref / zp_ref live in SMEM (per-tensor qparams, observer q_level='L').
    s = scale_ref[0]
    zp = zp_ref[0]
    inv_s = 1.0 / s                           # one scalar divide per grid step
    x = x_ref[...].astype(jnp.float32)
    if zp_is_integer:
        # Fold the (integer-valued) zero_point into the clamp bounds:
        #   (clamp(round(x/s - zp), qmin, qmax) + zp) * s
        #     == clamp(round(x/s), qmin + zp, qmax + zp) * s
        # Bounds are two scalar adds per grid step; vector chain is
        # mul, round, max, min, mul (~5 VALU ops / element instead of ~7).
        lo = qmin + zp
        hi = qmax + zp
        q = jnp.clip(jnp.round(x * inv_s), lo, hi)
        o_ref[...] = (q * s).astype(o_ref.dtype)
    else:
        # General (possibly fractional zero_point) path — exact PyTorch formula.
        q = jnp.clip(jnp.round(x * inv_s - zp), qmin, qmax)
        o_ref[...] = ((q + zp) * s).astype(o_ref.dtype)


def _pick_tile_bytes():
    """Per-generation block size: balance per-grid-step overhead vs VMEM."""
    kind = ""
    try:
        kind = jax.devices()[0].device_kind.lower()
    except Exception:
        pass
    if "v5e" in kind or "v5 lite" in kind or "v5lite" in kind:
        return 3 << 20     # ~820 GB/s HBM: per-step overhead already <10%
    if "v6" in kind:
        return 6 << 20     # ~1.4 TB/s HBM
    if "7" in kind:        # v7x: 3.2 TB/s — 2 MiB blocks pay ~20% step tax
        return 8 << 20
    return 4 << 20         # conservative default (v4 / v5p / unknown)


def _fake_quant_2d(x2d, scale_f, zp_f, *, qmin, qmax, zp_is_integer):
    """Run the fake-quant kernel over a lane-dense (rows, W) slab."""
    rows, W = x2d.shape
    dtype = x2d.dtype
    itemsize = jnp.dtype(dtype).itemsize
    sub = max(8, 32 // itemsize)              # sublane multiple (8 f32, 16 bf16)

    tile_bytes = _pick_tile_bytes()
    tile_rows = (tile_bytes // (W * itemsize)) // sub * sub
    tile_rows = max(sub, min(pl.cdiv(rows, sub) * sub, tile_rows))
    grid = (pl.cdiv(rows, tile_rows),)        # partial last block is masked

    # Live VMEM ≈ 2 buffers x (in + out) x tile; leave headroom, floor at 16 MiB.
    tile_actual = tile_rows * W * itemsize
    vmem_limit = min(48 << 20, max(16 << 20, 4 * tile_actual + (8 << 20)))

    n_elems = rows * W
    n_ops = 5 if zp_is_integer else 7
    cost = pl.CostEstimate(flops=n_ops * n_elems,
                           transcendentals=0,
                           bytes_accessed=2 * n_elems * itemsize)

    kernel = functools.partial(_quantize_kernel, qmin=qmin, qmax=qmax,
                               zp_is_integer=zp_is_integer)

    return pl.pallas_call(
        kernel,
        out_shape=jax.ShapeDtypeStruct((rows, W), dtype),
        grid=grid,
        in_specs=[
            pl.BlockSpec(memory_space=pltpu.MemorySpace.SMEM),     # scale (1,)
            pl.BlockSpec(memory_space=pltpu.MemorySpace.SMEM),     # zero_point (1,)
            pl.BlockSpec((tile_rows, W), lambda i: (i, 0)),        # activation tile
        ],
        out_specs=pl.BlockSpec((tile_rows, W), lambda i: (i, 0)),
        compiler_params=pltpu.CompilerParams(
            dimension_semantics=("parallel",),   # shard row range across TCs (v7x)
            vmem_limit_bytes=vmem_limit),
        cost_estimate=cost,
    )(scale_f, zp_f, x2d)


def quantizer_forward(x, scale, zero_point, bits=8, signed=True,
                      zp_is_integer=True, qaft=False, training=False):
    """Mirrors Quantizer.forward for q_level='L' (per-tensor qparams)."""
    if bits == 32:
        return x
    assert bits != 1, "Binary quantization is not supported"
    # TODO(synk): observer statistics / update_qparams are training-time buffer
    # updates (abstract in the base class); scale / zero_point are taken as given.

    # Derive the clamp range from bits + signedness (was previously baked to 8-bit).
    if signed:
        qmin = float(-(1 << (bits - 1)))
        qmax = float((1 << (bits - 1)) - 1)
    else:
        qmin = 0.0
        qmax = float((1 << bits) - 1)

    orig_shape = x.shape
    dtype = x.dtype
    n = x.size
    if n == 0:
        return x
    itemsize = jnp.dtype(dtype).itemsize
    sub = max(8, 32 // itemsize)

    scale_f = scale.reshape(-1).astype(jnp.float32)
    zp_f = zero_point.reshape(-1).astype(jnp.float32)

    def _jnp_ref(v):  # tiny-tail / tiny-tensor fallback (plain jnp, no kernel)
        q = jnp.clip(jnp.round(v / scale_f[0] - zp_f[0]), qmin, qmax)
        return ((q + zp_f[0]) * scale_f[0]).astype(dtype)

    run = functools.partial(_fake_quant_2d, scale_f=scale_f, zp_f=zp_f,
                            qmin=qmin, qmax=qmax, zp_is_integer=zp_is_integer)

    # Lane width: widest multiple of 128 that divides n (zero-copy reshape).
    # Prefer widths giving >= `sub` rows so row-blocks stay fully populated.
    candidates = [w for w in (1024, 512, 256, 128) if n % w == 0]
    W = None
    for w in candidates:
        if n // w >= sub:
            W = w
            break
    if W is None and candidates:
        W = candidates[0]

    if W is not None:
        # Fast path: pure metadata reshapes, no padding, no trailing slice.
        out2d = run(x.reshape(n // W, W))
        return out2d.reshape(orig_shape)

    # Ragged size (n not a multiple of 128): stream the bulk through the
    # kernel, handle the < 128-element tail with plain jnp — avoids a
    # full-tensor pad + slice round trip (~2x HBM traffic).
    W = 128
    main_n = (n // W) * W
    flat = x.reshape(-1)
    if main_n == 0:
        return _jnp_ref(flat).reshape(orig_shape)
    main_out = run(flat[:main_n].reshape(main_n // W, W)).reshape(-1)
    tail_out = _jnp_ref(flat[main_n:])
    return jnp.concatenate([main_out, tail_out]).reshape(orig_shape)


if __name__ == "__main__":
    BITS = 8
    QUANT_MIN = float(-(1 << (BITS - 1)))      # -128.0  (SignedQuantizer)
    QUANT_MAX = float((1 << (BITS - 1)) - 1)   #  127.0

    key = jax.random.PRNGKey(0)
    # NCHW activation, small shape consistent with a conv feature map
    x = jax.random.normal(key, (2, 4, 16, 16), dtype=jnp.float32)

    # Deterministic qparams (what a symmetric min/max observer would produce).
    # Registered-buffer shapes for q_level='L': scale (1,), zero_point (1,)
    scale = jnp.maximum(jnp.max(jnp.abs(x)) / QUANT_MAX,
                        jnp.float32(jnp.finfo(jnp.float32).eps)).reshape(1)
    zero_point = jnp.zeros((1,), dtype=jnp.float32)

    out = quantizer_forward(x, scale, zero_point, bits=BITS)
    out = jax.block_until_ready(out)

    # Pure-JAX reference of the PyTorch forward (exact divide form)
    ref = (jnp.clip(jnp.round(x / scale - zero_point), QUANT_MIN, QUANT_MAX)
           + zero_point) * scale

    assert out.shape == x.shape and out.dtype == x.dtype

    # Kernel uses x * (1/s); a value sitting exactly on a .5 rounding boundary
    # could differ by at most one quantization step vs the divide reference.
    step = float(scale[0])
    max_err = float(jnp.max(jnp.abs(out - ref)))
    assert max_err <= step * 1.001 + 1e-6, f"mismatch vs reference: {max_err}"

    # Output must lie on the quantization grid within the int8 range.
    q = out / scale - zero_point
    assert float(jnp.max(jnp.abs(q - jnp.round(q)))) < 1e-3
    assert QUANT_MIN - 1e-3 <= float(jnp.min(q)) and float(jnp.max(q)) <= QUANT_MAX + 1e-3

    # Ragged-size path (no multiple-of-128 element count) must also be exact.
    x_rag = jax.random.normal(jax.random.PRNGKey(1), (3, 5, 7), dtype=jnp.float32)
    s_rag = jnp.maximum(jnp.max(jnp.abs(x_rag)) / QUANT_MAX,
                        jnp.float32(jnp.finfo(jnp.float32).eps)).reshape(1)
    out_rag = jax.block_until_ready(quantizer_forward(x_rag, s_rag, zero_point))
    ref_rag = (jnp.clip(jnp.round(x_rag / s_rag - zero_point),
                        QUANT_MIN, QUANT_MAX) + zero_point) * s_rag
    assert out_rag.shape == x_rag.shape
    assert float(jnp.max(jnp.abs(out_rag - ref_rag))) <= float(s_rag[0]) * 1.001 + 1e-6

    print("KERNEL_OK")
</pallas_src>

<mosaic_0001>
module attributes {stable_mosaic.version = 11 : i64} {
  func.func @_quantize_kernel(%arg0: i32, %arg1: memref<1xf32, #tpu.memory_space<smem>>, %arg2: memref<1xf32, #tpu.memory_space<smem>>, %arg3: memref<8x256xf32, #tpu.memory_space<vmem>>, %arg4: memref<8x256xf32, #tpu.memory_space<vmem>>) attributes {dimension_semantics = [#tpu.dimension_semantics<parallel>], iteration_bounds = array<i64: 1>, scalar_prefetch = 0 : i64, scratch_operands = 0 : i64, tpu.core_type = #tpu.core_type<tc>, window_params = [{transform_indices = @transform_0, window_bounds = array<i64: 1>}, {transform_indices = @transform_1, window_bounds = array<i64: 1>}, {transform_indices = @transform_2, window_bounds = array<i64: 8, 256>}, {transform_indices = @transform_3, window_bounds = array<i64: 8, 256>}]} {
    %c0 = arith.constant 0 : index
    %0 = memref.load %arg1[%c0] : memref<1xf32, #tpu.memory_space<smem>>
    %c0_0 = arith.constant 0 : index
    %1 = memref.load %arg2[%c0_0] : memref<1xf32, #tpu.memory_space<smem>>
    %cst = arith.constant 1.000000e+00 : f32
    %2 = arith.divf %cst, %0 : f32
    %c0_1 = arith.constant 0 : index
    %c0_2 = arith.constant 0 : index
    %3 = vector.load %arg3[%c0_1, %c0_2] : memref<8x256xf32, #tpu.memory_space<vmem>>, vector<8x256xf32>
    %cst_3 = arith.constant -1.280000e+02 : f32
    %4 = arith.addf %cst_3, %1 : f32
    %cst_4 = arith.constant 1.270000e+02 : f32
    %5 = arith.addf %cst_4, %1 : f32
    %6 = vector.broadcast %2 : f32 to vector<8x256xf32>
    %7 = arith.mulf %3, %6 : vector<8x256xf32>
    %8 = math.roundeven %7 : vector<8x256xf32>
    %9 = vector.broadcast %4 : f32 to vector<8x256xf32>
    %10 = arith.maximumf %9, %8 : vector<8x256xf32>
    %11 = vector.broadcast %5 : f32 to vector<8x256xf32>
    %12 = arith.minimumf %11, %10 : vector<8x256xf32>
    %13 = vector.broadcast %0 : f32 to vector<8x256xf32>
    %14 = arith.mulf %12, %13 : vector<8x256xf32>
    %c0_5 = arith.constant 0 : index
    %c0_6 = arith.constant 0 : index
    %15 = vector.load %arg4[%c0_5, %c0_6] : memref<8x256xf32, #tpu.memory_space<vmem>>, vector<8x256xf32>
    tpu.vector_store %arg4[%c0_5, %c0_6], %14 {strides = array<i32>} : memref<8x256xf32, #tpu.memory_space<vmem>>, vector<8x256xf32>,
    return
  }
  func.func @transform_0(%arg0: i32) -> i32 {
    %c0_i32 = arith.constant 0 : i32
    %c0_i32_0 = arith.constant 0 : i32
    return %c0_i32 : i32
  }
  func.func @transform_1(%arg0: i32) -> i32 {
    %c0_i32 = arith.constant 0 : i32
    %c0_i32_0 = arith.constant 0 : i32
    return %c0_i32 : i32
  }
  func.func @transform_2(%arg0: i32) -> (i32, i32) {
    %c0_i32 = arith.constant 0 : i32
    %c0_i32_0 = arith.constant 0 : i32
    return %arg0, %c0_i32 : i32, i32
  }
  func.func @transform_3(%arg0: i32) -> (i32, i32) {
    %c0_i32 = arith.constant 0 : i32
    %c0_i32_0 = arith.constant 0 : i32
    return %arg0, %c0_i32 : i32, i32
  }
}

</mosaic_0001>

<llo_original>
// kernel: tpu_custom_call.1
$region0: #{tpu_custom_call.1}
  #allocation0 [shape = 'u32[]', space=smem, size = 0x4, offset = 0x4, fixed_abs, tag = 'smem constant byte address 0x4 - core index']
  #allocation1 [shape = 'u32[72,128]{1,0:T(1,128)}', space=vmem, size = 0x9000, scoped, tag = 'internal scratch']
  #allocation2 [shape = 'f32[1]{0:T(128)S(6)}', space=smem, size = 0x200, scoped, tag = 'scoped memory for tpu_custom_call.1']
  #allocation3 [shape = 'f32[1]{0:T(128)S(6)}', space=smem, size = 0x200, scoped, tag = 'scoped memory for tpu_custom_call.1']
  %s0 = inlined_call_operand.<no memory space> [shape: f32[1], index: 0, kind: input, shape index: {}]
  %s1 = inlined_call_operand.<no memory space> [shape: f32[1], index: 1, kind: input, shape index: {}]
  %s2 = inlined_call_operand.hbm [shape: f32[8,256], index: 2, kind: input, shape index: {}]
  %s3 = inlined_call_operand.hbm [shape: f32[8,256], index: 3, kind: output, shape index: {}]
  %s4 = sld [smem:[#allocation0]]
  $region26: #{tpu_custom_call.1} parent=0
    _
  %s6 = ssub.s32 1, %s4
  %s7 = scalar_select 0, %s6, %s4
  %8 = sst [smem:[#allocation2]] %s0
  %9 = sst [smem:[#allocation3]] %s1
  $region1: #{tpu_custom_call.1} parent=0
    #allocation4 [shape = 'u8[8192]{0}', space=vmem, size = 0x2000, scoped, tag = 'input window, operand 2, single buffered']
    #allocation5 [shape = 's32[1]{0}', space=sflag, size = 0x4, scoped, tag = 'scoped memory for tpu_custom_call.1']
    #allocation6 [shape = 's32[1]{0}', space=sflag, size = 0x4, scoped, tag = 'scoped memory for tpu_custom_call.1']
    #allocation7 [shape = 'u8[8192]{0}', space=vmem, size = 0x2000, scoped, tag = 'output window, operand 0, single buffered']
    %10 = vsyncpa [#allocation5], 0
    %11 = vsyncpa [#allocation6], 0
    // Predicated region
    $region2: #{tpu_custom_call.1} parent=1 // pred_check
      _
    $region3: #{tpu_custom_call.1} parent=1 // pred_check_branch
      %13 = sbr.rel (0) target = $region5
    $region4: #{tpu_custom_call.1} parent=1 // pred_region
      _
    $region5: #{tpu_custom_call.1} parent=1 // pred_fallthru
      _
    // Predicated region
    $region6: #{tpu_custom_call.1} parent=1 // pred_check
      _
    $region7: #{tpu_custom_call.1} parent=1 // pred_check_branch
      %15 = sbr.rel (0) target = $region9
    $region8: #{tpu_custom_call.1} parent=1 // pred_region
      _
    $region9: #{tpu_custom_call.1} parent=1 // pred_fallthru
      _
    // Predicated region
    $region10: #{tpu_custom_call.1} parent=1 // pred_check
      _
    $region11: #{tpu_custom_call.1} parent=1 // pred_check_branch
      %17 = sbr.rel (0) target = $region13
    $region12: #{tpu_custom_call.1} parent=1 // pred_region
      %19 = vsyncadd [#allocation5], 0
      %s21 = sshll.u32 %s2, 4
      %s22 = int_to_ptr.hbm [resolvable:$true] %s21
      %s23 = sshll.u32 [#allocation4], 4
      %s24 = int_to_ptr.vmem [resolvable:$true] %s23
      %26 = dma.hbm_to_vmem [thread:$0]  %s22, 256, %s24, [#allocation5]
    $region13: #{tpu_custom_call.1} parent=1 // pred_fallthru
      _
    // Predicated region
    $region14: #{tpu_custom_call.1} parent=1 // pred_check
      _
    $region15: #{tpu_custom_call.1} parent=1 // pred_check_branch
      %28 = sbr.rel (0) target = $region17
    $region16: #{tpu_custom_call.1} parent=1 // pred_region
      %30 = dma.done [#allocation5], 256
    $region17: #{tpu_custom_call.1} parent=1 // pred_fallthru
      _
    %s31 = sld [smem:[#allocation2]]
    %s32 = sld [smem:[#allocation3]]
    %v33 = vstv %s31
    %v34 = vrcp.pop %v33
    %v35 = vmul.f32 %v33, %v34
    %v36 = vsub.f32 1.0, %v35
    %v37 = vmul.f32 %v34, %v36
    %v38 = vadd.f32 %v34, %v37
    %vm39 = vweird.f32 %v33
    %vm40 = vweird.f32 %v34
    %vm41 = vmor %vm39, %vm40
    %v42 = vsel %vm41, %v34, %v38
    %v43 = vand.u32 2147483647, %v33
    %vm44 = vcmp.eq.f32.partialorder %v43, 8.507059e+37
    %v45 = vand.u32 %v33, 2147483648
    %v46 = vor.u32 1.1754944e-38, %v45
    %v47 = vsel %vm44, %v46, %v42
    %s48 = vtos %v47
    %v49 = vld [vmem:[#allocation4] sm:$0xff]
    %v50 = vld [vmem:[#allocation4 + $0x8] sm:$0xff]
    %s51 = sadd.f32 %s32, -128.0
    %s52 = sadd.f32 %s32, 127.0
    %v53 = vstv %s48
    %v54 = vmul.f32 %v49, %v53
    %v55 = vmul.f32 %v50, %v53
    %v56 = vround.ne.pseudo %v54
    %v57 = vround.ne.pseudo %v55
    %v58 = vstv %s51
    %v59 = vmax.f32 %v58, %v56
    %v60 = vmax.f32 %v58, %v57
    %v61 = vstv %s52
    %v62 = vmin.f32 %v61, %v59
    %v63 = vmin.f32 %v61, %v60
    %v64 = vstv %s31
    %v65 = vmul.f32 %v62, %v64
    %v66 = vmul.f32 %v63, %v64
    %67 = vst [vmem:[#allocation7] sm:$0xff] %v65
    %68 = vst [vmem:[#allocation7 + $0x8] sm:$0xff] %v66
    // Predicated region
    $region18: #{tpu_custom_call.1} parent=1 // pred_check
      _
    $region19: #{tpu_custom_call.1} parent=1 // pred_check_branch
      %70 = sbr.rel (0) target = $region21
    $region20: #{tpu_custom_call.1} parent=1 // pred_region
      %72 = vsyncadd [#allocation6], 0
      %s74 = sshll.u32 [#allocation7], 4
      %s75 = int_to_ptr.vmem [resolvable:$true] %s74
      %s76 = sshll.u32 %s3, 4
      %s77 = int_to_ptr.hbm [resolvable:$true] %s76
      %79 = dma.vmem_to_hbm [thread:$0]  %s75, 256, %s77, [#allocation6]
    $region21: #{tpu_custom_call.1} parent=1 // pred_fallthru
      _
    // Predicated region
    $region22: #{tpu_custom_call.1} parent=1 // pred_check
      _
    $region23: #{tpu_custom_call.1} parent=1 // pred_check_branch
      %81 = sbr.rel (0) target = $region25
    $region24: #{tpu_custom_call.1} parent=1 // pred_region
      %83 = dma.done [#allocation6], 256
    $region25: #{tpu_custom_call.1} parent=1 // pred_fallthru
      _
    %84 = vsyncpa [#allocation5], 1
    %85 = vsyncpa [#allocation6], 1

</llo_original>
